<compile_context>
chip_gen: v5e
topology: v5e:2x2
jax: 0.10.0
libtpu: 0.0.40
codegen_flags: <defaults>
</compile_context>

<pallas_src>
import functools

import jax
import jax.numpy as jnp
from jax.experimental import pallas as pl
from jax.experimental.pallas import tpu as pltpu

LANE = 128


def _round_up(x, m):
    return ((x + m - 1) // m) * m


def _plan_node_tiles(n):
    """Pick (n_padded, tm, tk) for the (row, k) aggregation grid.

    Guarantees >= 2 row blocks (megacore on v7x) and, for large graphs, a
    512-row tile so the Z k-slab is re-read half as often as at tm=256.
    """
    if n <= 128:
        return 128, 64, 128
    if n <= 512:
        n_p = _round_up(n, 256)
        return n_p, 128, 256
    n_p = _round_up(n, 512)
    return n_p, 512, 512


def _vmem_limit(bytes_needed):
    # Explicit scoped-VMEM limit: tile-plan bytes + headroom, clamped so it is
    # valid from v5e (16 MiB scoped default) through v7x (64 MiB physical,
    # leave Mosaic internal-scratch headroom -> cap at 48 MiB).
    return int(min(max(bytes_needed + (8 << 20), 16 << 20), 48 << 20))


# ----------------------------------------------------------------------------
# Kernel 1: row-tiled feature transform  Y = X @ W + b  [+ ReLU]
#   X tile and W are bf16; f32 MXU accumulation; f32 bias/ReLU epilogue.
# ----------------------------------------------------------------------------
def _linear_kernel(x_ref, w_ref, b_ref, o_ref, *, apply_relu):
    y = jnp.dot(x_ref[...], w_ref[...], preferred_element_type=jnp.float32)
    y = y + b_ref[...]
    if apply_relu:
        y = jnp.maximum(y, 0.0)
    o_ref[...] = y.astype(o_ref.dtype)


def linear_pallas(x, w, b, *, apply_relu, tm, out_dtype):
    n_p, in_p = x.shape
    out_p = w.shape[1]
    grid = (n_p // tm,)
    kernel = functools.partial(_linear_kernel, apply_relu=apply_relu)

    out_bytes = jnp.dtype(out_dtype).itemsize
    need = (2 * (tm * in_p * 2 + tm * out_p * out_bytes)
            + 2 * (in_p * out_p * 2 + out_p * 4)
            + tm * out_p * 4)
    flops = 2 * n_p * in_p * out_p
    bytes_accessed = (n_p * in_p * 2 + in_p * out_p * 2
                      + n_p * out_p * out_bytes + out_p * 4)

    return pl.pallas_call(
        kernel,
        out_shape=jax.ShapeDtypeStruct((n_p, out_p), out_dtype),
        grid_spec=pltpu.PrefetchScalarGridSpec(
            num_scalar_prefetch=0,
            grid=grid,
            in_specs=[
                pl.BlockSpec((tm, in_p), lambda i: (i, 0)),      # X row tile (bf16)
                pl.BlockSpec((in_p, out_p), lambda i: (0, 0)),   # W resident (bf16)
                pl.BlockSpec((1, out_p), lambda i: (0, 0)),      # b resident (f32)
            ],
            out_specs=pl.BlockSpec((tm, out_p), lambda i: (i, 0)),
        ),
        compiler_params=pltpu.CompilerParams(
            dimension_semantics=("parallel",),
            vmem_limit_bytes=_vmem_limit(need),
        ),
        cost_estimate=pl.CostEstimate(
            flops=flops, transcendentals=0, bytes_accessed=bytes_accessed),
    )(x, w, b)


# ----------------------------------------------------------------------------
# Kernel 2: tiled aggregation  Y = A_hat @ Z + b  [+ ReLU]
#   A_hat and Z streamed in bf16 (native MXU path); f32 VMEM accumulator.
# ----------------------------------------------------------------------------
def _aggregate_kernel(a_ref, z_ref, b_ref, o_ref, acc_ref, *, apply_relu):
    k = pl.program_id(1)

    @pl.when(k == 0)
    def _():
        acc_ref[...] = jnp.zeros_like(acc_ref)

    acc_ref[...] += jnp.dot(a_ref[...], z_ref[...],
                            preferred_element_type=jnp.float32)

    @pl.when(k == pl.num_programs(1) - 1)
    def _():
        y = acc_ref[...] + b_ref[...]
        if apply_relu:
            y = jnp.maximum(y, 0.0)
        o_ref[...] = y.astype(o_ref.dtype)


def aggregate_pallas(a_bf16, z, b, *, apply_relu, tm, tk, out_dtype):
    n_p = a_bf16.shape[0]
    f_p = z.shape[1]
    grid = (n_p // tm, n_p // tk)
    kernel = functools.partial(_aggregate_kernel, apply_relu=apply_relu)

    out_bytes = jnp.dtype(out_dtype).itemsize
    need = (2 * (tm * tk * 2 + tk * f_p * 2 + tm * f_p * out_bytes + f_p * 4)
            + tm * f_p * 4)
    flops = 2 * n_p * n_p * f_p
    bytes_accessed = (n_p * n_p * 2                       # bf16 adjacency stream
                      + (n_p // tm) * n_p * f_p * 2       # bf16 Z re-read / row tile
                      + n_p * f_p * out_bytes + f_p * 4)  # output + bias

    return pl.pallas_call(
        kernel,
        out_shape=jax.ShapeDtypeStruct((n_p, f_p), out_dtype),
        grid_spec=pltpu.PrefetchScalarGridSpec(
            num_scalar_prefetch=0,
            grid=grid,
            in_specs=[
                pl.BlockSpec((tm, tk), lambda i, k: (i, k)),   # A_hat tile (bf16)
                pl.BlockSpec((tk, f_p), lambda i, k: (k, 0)),  # Z k-slab (bf16)
                pl.BlockSpec((1, f_p), lambda i, k: (0, 0)),   # bias (f32, resident)
            ],
            out_specs=pl.BlockSpec((tm, f_p), lambda i, k: (i, 0)),
            scratch_shapes=[pltpu.VMEM((tm, f_p), jnp.float32)],
        ),
        compiler_params=pltpu.CompilerParams(
            dimension_semantics=("parallel", "arbitrary"),
            vmem_limit_bytes=_vmem_limit(need),
        ),
        cost_estimate=pl.CostEstimate(
            flops=flops, transcendentals=0, bytes_accessed=bytes_accessed),
    )(a_bf16, z, b)


# ----------------------------------------------------------------------------
# GCN module (forward only)
# ----------------------------------------------------------------------------
def layer_dims(in_dim, hid_dim, out_dim, n_layers):
    if n_layers == 1:
        return [(in_dim, out_dim)]
    ds = [(in_dim, hid_dim)]
    for _ in range(n_layers - 2):
        ds.append((hid_dim, hid_dim))
    ds.append((hid_dim, out_dim))
    return ds


def init_gcn_params(key, dims):
    """Deterministic glorot-uniform weights + zero bias (GraphConv shapes)."""
    params = []
    for fan_in, fan_out in dims:
        key, sub = jax.random.split(key)
        limit = (6.0 / (fan_in + fan_out)) ** 0.5
        w = jax.random.uniform(sub, (fan_in, fan_out), jnp.float32, -limit, limit)
        params.append((w, jnp.zeros((fan_out,), jnp.float32)))
    return params


def normalize_adjacency(adj):
    """A_hat = D^-1/2 A D^-1/2 with degrees clamped to >= 1 (DGL behavior)."""
    deg = jnp.clip(jnp.sum(adj, axis=1), 1.0, None)
    d_inv_sqrt = deg ** -0.5
    return adj * d_inv_sqrt[:, None] * d_inv_sqrt[None, :]


def gcn_forward(a_hat, x, params, dims):
    """a_hat: (N, N) f32 normalized adjacency; x: (N, in_dim) f32."""
    n = x.shape[0]
    n_p, tm, tk = _plan_node_tiles(n)

    # Pad node axis to the tile plan.  The dominant N^2 adjacency operand and
    # all intermediate activations are carried in bf16 (f32 accumulation in
    # the kernels); only the final layer output is f32.
    a_pad = jnp.pad(a_hat, ((0, n_p - n), (0, n_p - n))).astype(jnp.bfloat16)
    in_p0 = _round_up(dims[0][0], LANE)
    h = jnp.pad(x, ((0, n_p - n), (0, in_p0 - dims[0][0]))).astype(jnp.bfloat16)

    n_layers = len(params)
    for li, (w, b) in enumerate(params):
        in_d, out_d = dims[li]
        in_p = _round_up(in_d, LANE)
        out_p = _round_up(out_d, LANE)
        w_p = jnp.pad(w, ((0, in_p - in_d), (0, out_p - out_d))).astype(jnp.bfloat16)
        b_p = jnp.pad(b, (0, out_p - out_d)).reshape(1, out_p)  # f32
        relu = li < n_layers - 1
        out_dtype = jnp.bfloat16 if relu else jnp.float32
        if in_d > out_d:
            # transform first (smaller aggregated width), then aggregate + bias
            z = linear_pallas(h, w_p, jnp.zeros((1, out_p), jnp.float32),
                              apply_relu=False, tm=tm, out_dtype=jnp.bfloat16)
            h = aggregate_pallas(a_pad, z, b_p, apply_relu=relu,
                                 tm=tm, tk=tk, out_dtype=out_dtype)
        else:
            # aggregate raw features first, then transform + bias
            z = aggregate_pallas(a_pad, h, jnp.zeros((1, in_p), jnp.float32),
                                 apply_relu=False, tm=tm, tk=tk,
                                 out_dtype=jnp.bfloat16)
            h = linear_pallas(z, w_p, b_p, apply_relu=relu, tm=tm,
                              out_dtype=out_dtype)
    return h[:n, :dims[-1][1]]


# ----------------------------------------------------------------------------
# Reference (plain JAX, f32) for sanity check
# ----------------------------------------------------------------------------
def gcn_forward_ref(a_hat, x, params):
    n_layers = len(params)
    for i in range(n_layers - 1):
        w, b = params[i]
        x = jax.nn.relu(a_hat @ (x @ w) + b[None, :])
    w, b = params[-1]
    return a_hat @ (x @ w) + b[None, :]


if __name__ == "__main__":
    key = jax.random.PRNGKey(0)

    # Small but grid-exercising shapes: 384 nodes -> padded 512, (4, 2) agg grid.
    # 3 layers (48 -> 96 -> 96 -> 32) hits both matmul orderings.
    N, in_dim, hid_dim, out_dim, n_layers = 384, 48, 96, 32, 3

    k_adj, k_x, k_p = jax.random.split(key, 3)

    # Deterministic random undirected graph (symmetric 0/1 adjacency).
    raw = jax.random.uniform(k_adj, (N, N))
    adj = (raw + raw.T > 1.4).astype(jnp.float32)
    adj = adj * (1.0 - jnp.eye(N, dtype=jnp.float32))  # no self-loops (DGL default)
    a_hat = normalize_adjacency(adj)

    x = jax.random.normal(k_x, (N, in_dim), jnp.float32)
    dims = layer_dims(in_dim, hid_dim, out_dim, n_layers)
    params = init_gcn_params(k_p, dims)

    out = gcn_forward(a_hat, x, params, dims)
    out = jax.block_until_ready(out)

    ref = gcn_forward_ref(a_hat, x, params)
    assert out.shape == (N, out_dim)
    # Adjacency, weights and intermediate activations are bf16 (f32 accumulate),
    # so compare at bf16-level tolerance.
    assert jnp.allclose(out, ref, atol=3e-2, rtol=3e-2), float(
        jnp.max(jnp.abs(out - ref)))

    print("KERNEL_OK")
</pallas_src>

<mosaic_0001>
module attributes {stable_mosaic.version = 11 : i64} {
  func.func @_aggregate_kernel(%arg0: i32, %arg1: i32, %arg2: memref<128x256xbf16, #tpu.memory_space<vmem>>, %arg3: memref<256x128xbf16, #tpu.memory_space<vmem>>, %arg4: memref<1x128xf32, #tpu.memory_space<vmem>>, %arg5: memref<128x128xbf16, #tpu.memory_space<vmem>>, %arg6: memref<128x128xf32, #tpu.memory_space<vmem>>) attributes {dimension_semantics = [#tpu.dimension_semantics<parallel>, #tpu.dimension_semantics<arbitrary>], iteration_bounds = array<i64: 4, 2>, scalar_prefetch = 0 : i64, scratch_operands = 1 : i64, tpu.core_type = #tpu.core_type<tc>, window_params = [{transform_indices = @transform_0, window_bounds = array<i64: 128, 256>}, {transform_indices = @transform_1, window_bounds = array<i64: 256, 128>}, {pipeline_mode = #tpu.pipeline_mode<synchronous>, transform_indices = @transform_2, window_bounds = array<i64: 1, 128>}, {transform_indices = @transform_3, window_bounds = array<i64: 128, 128>}]} {
    %c0_i32 = arith.constant 0 : i32
    %0 = arith.cmpi eq, %arg1, %c0_i32 : i32
    %1 = arith.extui %0 : i1 to i32
    %c0_i32_0 = arith.constant 0 : i32
    %2 = arith.cmpi ne, %1, %c0_i32_0 : i32
    scf.if %2 {
      %cst_9 = arith.constant 0.000000e+00 : f32
      %12 = vector.broadcast %cst_9 : f32 to vector<128x128xf32>
      %c0_10 = arith.constant 0 : index
      %c0_11 = arith.constant 0 : index
      %13 = vector.load %arg6[%c0_10, %c0_11] : memref<128x128xf32, #tpu.memory_space<vmem>>, vector<128x128xf32>
      tpu.vector_store %arg6[%c0_10, %c0_11], %12 {strides = array<i32>} : memref<128x128xf32, #tpu.memory_space<vmem>>, vector<128x128xf32>,
    } else {
    }
    %c0 = arith.constant 0 : index
    %c0_1 = arith.constant 0 : index
    %3 = vector.load %arg6[%c0, %c0_1] : memref<128x128xf32, #tpu.memory_space<vmem>>, vector<128x128xf32>
    %c0_2 = arith.constant 0 : index
    %c0_3 = arith.constant 0 : index
    %4 = vector.load %arg2[%c0_2, %c0_3] : memref<128x256xbf16, #tpu.memory_space<vmem>>, vector<128x256xbf16>
    %c0_4 = arith.constant 0 : index
    %c0_5 = arith.constant 0 : index
    %5 = vector.load %arg3[%c0_4, %c0_5] : memref<256x128xbf16, #tpu.memory_space<vmem>>, vector<256x128xbf16>
    %cst = arith.constant dense<0.000000e+00> : vector<128x128xf32>
    %6 = tpu.matmul %4, %5, %cst {dimension_numbers = #tpu.dot_dimension_numbers<[1], [0], [0], [1], [0, 0, 1, 1], [], []>} : vector<128x256xbf16>, vector<256x128xbf16>, vector<128x128xf32> -> vector<128x128xf32>
    %7 = arith.addf %3, %6 : vector<128x128xf32>
    %c0_6 = arith.constant 0 : index
    %c0_7 = arith.constant 0 : index
    %8 = vector.load %arg6[%c0_6, %c0_7] : memref<128x128xf32, #tpu.memory_space<vmem>>, vector<128x128xf32>
    tpu.vector_store %arg6[%c0_6, %c0_7], %7 {strides = array<i32>} : memref<128x128xf32, #tpu.memory_space<vmem>>, vector<128x128xf32>,
    %c1_i32 = arith.constant 1 : i32
    %9 = arith.cmpi eq, %arg1, %c1_i32 : i32
    %10 = arith.extui %9 : i1 to i32
    %c0_i32_8 = arith.constant 0 : i32
    %11 = arith.cmpi ne, %10, %c0_i32_8 : i32
    scf.if %11 {
      %c0_9 = arith.constant 0 : index
      %c0_10 = arith.constant 0 : index
      %12 = vector.load %arg6[%c0_9, %c0_10] : memref<128x128xf32, #tpu.memory_space<vmem>>, vector<128x128xf32>
      %c0_11 = arith.constant 0 : index
      %c0_12 = arith.constant 0 : index
      %13 = vector.load %arg4[%c0_11, %c0_12] : memref<1x128xf32, #tpu.memory_space<vmem>>, vector<1x128xf32>
      %14 = vector.broadcast %13 : vector<1x128xf32> to vector<128x128xf32>
      %15 = arith.addf %12, %14 : vector<128x128xf32>
      %16 = arith.truncf %15 : vector<128x128xf32> to vector<128x128xbf16>
      %c0_13 = arith.constant 0 : index
      %c0_14 = arith.constant 0 : index
      %17 = vector.load %arg5[%c0_13, %c0_14] : memref<128x128xbf16, #tpu.memory_space<vmem>>, vector<128x128xbf16>
      tpu.vector_store %arg5[%c0_13, %c0_14], %16 {strides = array<i32>} : memref<128x128xbf16, #tpu.memory_space<vmem>>, vector<128x128xbf16>,
    } else {
    }
    return
  }
  func.func @transform_0(%arg0: i32, %arg1: i32) -> (i32, i32) {
    %c0_i32 = arith.constant 0 : i32
    return %arg0, %arg1 : i32, i32
  }
  func.func @transform_1(%arg0: i32, %arg1: i32) -> (i32, i32) {
    %c0_i32 = arith.constant 0 : i32
    %c0_i32_0 = arith.constant 0 : i32
    return %arg1, %c0_i32 : i32, i32
  }
  func.func @transform_2(%arg0: i32, %arg1: i32) -> (i32, i32) {
    %c0_i32 = arith.constant 0 : i32
    %c0_i32_0 = arith.constant 0 : i32
    %c0_i32_1 = arith.constant 0 : i32
    return %c0_i32, %c0_i32_0 : i32, i32
  }
  func.func @transform_3(%arg0: i32, %arg1: i32) -> (i32, i32) {
    %c0_i32 = arith.constant 0 : i32
    %c0_i32_0 = arith.constant 0 : i32
    return %arg0, %c0_i32 : i32, i32
  }
}

</mosaic_0001>

<llo_original>
// kernel: tpu_custom_call.1
$region0: #{tpu_custom_call.1}
  #allocation0 [shape = 'u32[]', space=smem, size = 0x4, offset = 0x4, fixed_abs, tag = 'smem constant byte address 0x4 - core index']
  #allocation1 [shape = 'u32[72,128]{1,0:T(1,128)}', space=vmem, size = 0x9000, scoped, tag = 'internal scratch']
  #allocation2 [shape = 'f32[128,128]{1,0:T(8,128)}', space=vmem, size = 0x10000, scoped, tag = 'scratch operand']
  %s0 = inlined_call_operand.hbm [shape: bf16[512,512], index: 0, kind: input, shape index: {}]
  %s1 = inlined_call_operand.hbm [shape: bf16[512,128], index: 1, kind: input, shape index: {}]
  %s2 = inlined_call_operand.vmem [shape: f32[1,128], index: 2, kind: input, shape index: {}]
  %s3 = inlined_call_operand.hbm [shape: bf16[512,128], index: 3, kind: output, shape index: {}]
  %s4 = sld [smem:[#allocation0]]
  $region61: #{tpu_custom_call.1} parent=0
    _
  %s6 = ssub.s32 1, %s4
  %s7 = scalar_select 0, %s6, %s4
  $region1: #{tpu_custom_call.1} parent=0
    #allocation3 [shape = 'u8[131072]{0}', space=vmem, size = 0x20000, scoped, tag = 'input window, operand 0']
    #allocation4 [shape = 's32[2]{0}', space=sflag, size = 0x8, scoped, tag = 'scoped memory for tpu_custom_call.1']
    #allocation5 [shape = 's32[2]{0}', space=sflag, size = 0x8, scoped, tag = 'scoped memory for tpu_custom_call.1']
    #allocation6 [shape = 'u8[131072]{0}', space=vmem, size = 0x20000, scoped, tag = 'input window, operand 1']
    #allocation7 [shape = 's32[2]{0}', space=sflag, size = 0x8, scoped, tag = 'scoped memory for tpu_custom_call.1']
    #allocation8 [shape = 'u8[65536]{0}', space=vmem, size = 0x10000, scoped, tag = 'output window, operand 0']
    %8 = vsyncpa [#allocation4], 0
    %s9 = scalar_lea.sflag [#allocation4], 1
    %10 = vsyncpa %s9, 0
    %11 = vsyncpa [#allocation7], 0
    %s12 = scalar_lea.sflag [#allocation7], 1
    %13 = vsyncpa %s12, 0
    %14 = vsyncpa [#allocation5], 0
    %s15 = scalar_lea.sflag [#allocation5], 1
    %16 = vsyncpa %s15, 0
    loop: start=0, step=1, limit=10
    $region2: #{tpu_custom_call.1} parent=1 // loop_pre_header
      _
    $region3: #{tpu_custom_call.1} parent=1 // loop_header
      %s18 = sphi 0, %s22
      %p19 = scmp.ge.s32.totalorder %s18, 10
      %s25 = sphi 0, %s37
      %s26 = sphi 0, %s33
      %s27 = sphi 0, %s25
      %s28 = sphi 0, %s26
      %s29 = sphi 0, %s27
      %s30 = sphi 0, %s28
      %s42 = sphi 0, %s44
      %s45 = sphi 0, %s42
      %s46 = sphi 0, %s45
      %s62 = sphi 0, %s46
      %s68 = sphi 0, %s70
      %s71 = sphi 0, %s68
      %s72 = sphi 0, %s71
      %s88 = sphi 0, %s72
      %s92 = sphi 0, %s92
      %s94 = sphi 0, %s92
      %s95 = sphi 0, %s94
      %s109 = sphi 0, %s95
      %s115 = sphi 0, %s117
      %s118 = sphi 0, %s115
      %s119 = sphi 0, %s118
      %s135 = sphi 0, %s119
    $region4: #{tpu_custom_call.1} parent=1 // loop_header_branch
      %21 = sbr.rel (%p19) target = $region8
    $region5: #{tpu_custom_call.1} parent=1 // loop_body
      %s23 = ssub.s32 %s18, 1
      %s24 = ssub.s32 %s18, 2
      %s31 = sadd.s32 1, %s26
      %p32 = scmp.ge.s32.totalorder %s31, 2
      %s33 = scalar_select %p32, 0, %s31
      %s34 = sadd.s32 1, %s25
      %s35 = scalar_select %p32, %s34, %s25
      %p36 = scmp.ge.s32.totalorder %s35, 4
      %s37 = scalar_select %p36, 0, %s35
      %s38 = ssub.s32 %s25, %s37
      %s39 = ssub.s32 %s26, %s33
      %s40 = sor.u32 %s38, %s39
      %p41 = scmp.eq.s32.totalorder %s40, 0
      %s43 = sadd.s32 %s42, 1
      %s44 = scalar_select %p41, %s42, %s43
      %p47 = pneg %p41
      %p48 = scmp.eq.s32.totalorder %s18, 7
      %p49 = por %p47, %p48
      %p50 = scmp.ne.s32.totalorder %s42, %s45
      %p51 = scmp.eq.s32.totalorder %s18, 0
      %p52 = por %p50, %p51
      %p53 = scmp.ne.s32.totalorder %s42, %s45
      %p54 = scmp.eq.s32.totalorder %s23, 7
      %p55 = por %p53, %p54
      %p56 = scmp.ne.s32.totalorder %s45, %s46
      %p57 = scmp.eq.s32.totalorder %s23, 0
      %p58 = por %p56, %p57
      %p59 = scmp.ne.s32.totalorder %s45, %s46
      %p60 = scmp.eq.s32.totalorder %s24, 7
      %p61 = por %p59, %p60
      %p63 = scmp.ne.s32.totalorder %s46, %s62
      %p64 = scmp.eq.s32.totalorder %s24, 0
      %p65 = por %p63, %p64
      %s66 = ssub.s32 %s26, %s33
      %p67 = scmp.eq.s32.totalorder %s66, 0
      %s69 = sadd.s32 %s68, 1
      %s70 = scalar_select %p67, %s68, %s69
      %p73 = pneg %p67
      %p74 = scmp.eq.s32.totalorder %s18, 7
      %p75 = por %p73, %p74
      %p76 = scmp.ne.s32.totalorder %s68, %s71
      %p77 = scmp.eq.s32.totalorder %s18, 0
      %p78 = por %p76, %p77
      %p79 = scmp.ne.s32.totalorder %s68, %s71
      %p80 = scmp.eq.s32.totalorder %s23, 7
      %p81 = por %p79, %p80
      %p82 = scmp.ne.s32.totalorder %s71, %s72
      %p83 = scmp.eq.s32.totalorder %s23, 0
      %p84 = por %p82, %p83
      %p85 = scmp.ne.s32.totalorder %s71, %s72
      %p86 = scmp.eq.s32.totalorder %s24, 7
      %p87 = por %p85, %p86
      %p89 = scmp.ne.s32.totalorder %s72, %s88
      %p90 = scmp.eq.s32.totalorder %s24, 0
      %p91 = por %p89, %p90
      %s93 = sadd.s32 %s92, 1
      %p96 = scmp.eq.s32.totalorder %s18, 7
      %p97 = scmp.ne.s32.totalorder %s92, %s94
      %p98 = scmp.eq.s32.totalorder %s18, 0
      %p99 = por %p97, %p98
      %p100 = scmp.ne.s32.totalorder %s92, %s94
      %p101 = scmp.eq.s32.totalorder %s23, 7
      %p102 = por %p100, %p101
      %p103 = scmp.ne.s32.totalorder %s94, %s95
      %p104 = scmp.eq.s32.totalorder %s23, 0
      %p105 = por %p103, %p104
      %p106 = scmp.ne.s32.totalorder %s94, %s95
      %p107 = scmp.eq.s32.totalorder %s24, 7
      %p108 = por %p106, %p107
      %p110 = scmp.ne.s32.totalorder %s95, %s109
      %p111 = scmp.eq.s32.totalorder %s24, 0
      %p112 = por %p110, %p111
      %s113 = ssub.s32 %s25, %s37
      %p114 = scmp.eq.s32.totalorder %s113, 0
      %s116 = sadd.s32 %s115, 1
      %s117 = scalar_select %p114, %s115, %s116
      %p120 = pneg %p114
      %p121 = scmp.eq.s32.totalorder %s18, 7
      %p122 = por %p120, %p121
      %p123 = scmp.ne.s32.totalorder %s115, %s118
      %p124 = scmp.eq.s32.totalorder %s18, 0
      %p125 = por %p123, %p124
      %p126 = scmp.ne.s32.totalorder %s115, %s118
      %p127 = scmp.eq.s32.totalorder %s23, 7
      %p128 = por %p126, %p127
      %p129 = scmp.ne.s32.totalorder %s118, %s119
      %p130 = scmp.eq.s32.totalorder %s23, 0
      %p131 = por %p129, %p130
      %p132 = scmp.ne.s32.totalorder %s118, %s119
      %p133 = scmp.eq.s32.totalorder %s24, 7
      %p134 = por %p132, %p133
      %p136 = scmp.ne.s32.totalorder %s119, %s135
      %p137 = scmp.eq.s32.totalorder %s24, 0
      %p138 = por %p136, %p137
      %p139 = scmp.le.s32.totalorder 1, %s18
      %p140 = scmp.lt.s32.totalorder %s18, 9
      %p141 = pnand %p139, %p140
      %p142 = pneg %p141
      // Predicated region
      $region9: #{tpu_custom_call.1} parent=5 // pred_check
        _
      $region10: #{tpu_custom_call.1} parent=5 // pred_check_branch
        %144 = sbr.rel (%p141) target = $region12
      $region11: #{tpu_custom_call.1} parent=5 // pred_region
        %s145 = ssub.s32 %s18, 1
        // Predicated region
        $region13: #{tpu_custom_call.1} parent=11 // pred_check
          %p146 = pneg %p105
        $region14: #{tpu_custom_call.1} parent=11 // pred_check_branch
          %148 = sbr.rel (%p146) target = $region16
        $region15: #{tpu_custom_call.1} parent=11 // pred_region
          _
        $region16: #{tpu_custom_call.1} parent=11 // pred_fallthru
          _
      $region12: #{tpu_custom_call.1} parent=5 // pred_fallthru
        _
      %p149 = scmp.lt.s32.totalorder %s18, 8
      // Predicated region
      $region17: #{tpu_custom_call.1} parent=5 // pred_check
        %p150 = pneg %p149
      $region18: #{tpu_custom_call.1} parent=5 // pred_check_branch
        %152 = sbr.rel (%p150) target = $region20
      $region19: #{tpu_custom_call.1} parent=5 // pred_region
        // Predicated region
        $region21: #{tpu_custom_call.1} parent=19 // pred_check
          %p153 = pneg %p52
        $region22: #{tpu_custom_call.1} parent=19 // pred_check_branch
          %155 = sbr.rel (%p153) target = $region24
        $region23: #{tpu_custom_call.1} parent=19 // pred_region
          %s156 = sand.u32 %s42, 1
          %s157 = scalar_lea.sflag [#allocation4], %s156
          %s158 = sand.u32 %s42, 1
          %s159 = smul.addr %s158, 128
          %s160 = scalar_lea.vmem [#allocation3], %s159
          %s161 = smul.u32 16, %s25
          %s162 = smul.u32 2, %s26
          %164 = vsyncadd %s157, 0
          %s165 = smul.addr %s161, 4
          %s166 = sadd.s32 %s162, %s165
          %s167 = smul.addr %s166, 4
          %s168 = scalar_lea.hbm %s0, %s167
          %s169 = sshll.u32 %s168, 4
          %s170 = int_to_ptr.hbm [resolvable:$true] %s169
          %s171 = sshll.u32 %s160, 4
          %s172 = int_to_ptr.vmem [resolvable:$true] %s171
          %177 = dma.hbm_to_vmem [thread:$0]  %s170, 2048, %s172, %s157, 256, 128, 8
        $region24: #{tpu_custom_call.1} parent=19 // pred_fallthru
          _
        // Predicated region
        $region25: #{tpu_custom_call.1} parent=19 // pred_check
          %p178 = pneg %p78
        $region26: #{tpu_custom_call.1} parent=19 // pred_check_branch
          %180 = sbr.rel (%p178) target = $region28
        $region27: #{tpu_custom_call.1} parent=19 // pred_region
          %s181 = sand.u32 %s68, 1
          %s182 = scalar_lea.sflag [#allocation7], %s181
          %s183 = sand.u32 %s68, 1
          %s184 = smul.addr %s183, 128
          %s185 = scalar_lea.vmem [#allocation6], %s184
          %s186 = smul.u32 32, %s26
          %188 = vsyncadd %s182, 0
          %s189 = smul.addr %s186, 4
          %s190 = scalar_lea.hbm %s1, %s189
          %s191 = sshll.u32 %s190, 4
          %s192 = int_to_ptr.hbm [resolvable:$true] %s191
          %s193 = sshll.u32 %s185, 4
          %s194 = int_to_ptr.vmem [resolvable:$true] %s193
          %199 = dma.hbm_to_vmem [thread:$0]  %s192, 2048, %s194, %s182, 64, 64, 4
        $region28: #{tpu_custom_call.1} parent=19 // pred_fallthru
          _
      $region20: #{tpu_custom_call.1} parent=5 // pred_fallthru
        _
      %p200 = scmp.le.s32.totalorder 1, %s18
      %p201 = scmp.lt.s32.totalorder %s18, 9
      %p202 = pnand %p200, %p201
      %p203 = pneg %p202
      // Predicated region
      $region29: #{tpu_custom_call.1} parent=5 // pred_check
        _
      $region30: #{tpu_custom_call.1} parent=5 // pred_check_branch
        %205 = sbr.rel (%p202) target = $region32
      $region31: #{tpu_custom_call.1} parent=5 // pred_region
        %s206 = ssub.s32 %s18, 1
        %s207 = sand.u32 %s45, 1
        %s208 = scalar_lea.sflag [#allocation4], %s207
        %s209 = sand.u32 %s45, 1
        %s210 = smul.addr %s209, 128
        %s211 = scalar_lea.vmem [#allocation3], %s210
        // Predicated region
        $region33: #{tpu_custom_call.1} parent=31 // pred_check
          %p212 = pneg %p58
        $region34: #{tpu_custom_call.1} parent=31 // pred_check_branch
          %214 = sbr.rel (%p212) target = $region36
        $region35: #{tpu_custom_call.1} parent=31 // pred_region
          %216 = dma.done %s208, 2048
        $region36: #{tpu_custom_call.1} parent=31 // pred_fallthru
          _
        %s217 = sand.u32 %s71, 1
        %s218 = scalar_lea.sflag [#allocation7], %s217
        %s219 = sand.u32 %s71, 1
        %s220 = smul.addr %s219, 128
        %s221 = scalar_lea.vmem [#allocation6], %s220
        // Predicated region
        $region37: #{tpu_custom_call.1} parent=31 // pred_check
          %p222 = pneg %p84
        $region38: #{tpu_custom_call.1} parent=31 // pred_check_branch
          %224 = sbr.rel (%p222) target = $region40
        $region39: #{tpu_custom_call.1} parent=31 // pred_region
          %226 = dma.done %s218, 2048
        $region40: #{tpu_custom_call.1} parent=31 // pred_fallthru
          _
        %s227 = sand.u32 %s45, 1
        %s228 = scalar_lea.sflag [#allocation4], %s227
        %s229 = sand.u32 %s45, 1
        %s230 = smul.addr %s229, 128
        %s231 = scalar_lea.vmem [#allocation3], %s230
        %p232 = pneg %p58
        %p233 = pneg %p55
        %s234 = sand.u32 %s71, 1
        %s235 = scalar_lea.sflag [#allocation7], %s234
        %s236 = sand.u32 %s71, 1
        %s237 = smul.addr %s236, 128
        %s238 = scalar_lea.vmem [#allocation6], %s237
        %p239 = pneg %p84
        %p240 = pneg %p81
        %p241 = pneg %p105
        %p242 = pneg %p102
        %p243 = pneg %p131
        %p244 = pneg %p128
        %s245 = sand.u32 %s118, 1
        %s246 = scalar_lea.sflag [#allocation5], %s245
        %s247 = sand.u32 %s118, 1
        %s248 = smul.addr %s247, 64
        %s249 = scalar_lea.vmem [#allocation8], %s248
        %s250 = smul.u32 16, %s27
        %s251 = smul.u32 2, %s28
        %s252 = smul.u32 32, %s28
        %s253 = smul.u32 16, %s27
        %p254 = scmp.eq.s32.totalorder %s28, 0
        // Predicated region
        $region41: #{tpu_custom_call.1} parent=31 // pred_check
          %p255 = pneg %p254
        $region42: #{tpu_custom_call.1} parent=31 // pred_check_branch
          %257 = sbr.rel (%p255) target = $region44
        $region43: #{tpu_custom_call.1} parent=31 // pred_region
          %258 = vst [vmem:[#allocation2] sm:$0xff] 0.0
          %259 = vst [vmem:[#allocation2 + $0x8] sm:$0xff] 0.0
          %260 = vst [vmem:[#allocation2 + $0x10] sm:$0xff] 0.0
          %261 = vst [vmem:[#allocation2 + $0x18] sm:$0xff] 0.0
          %262 = vst [vmem:[#allocation2 + $0x20] sm:$0xff] 0.0
          %263 = vst [vmem:[#allocation2 + $0x28] sm:$0xff] 0.0
          %264 = vst [vmem:[#allocation2 + $0x30] sm:$0xff] 0.0
          %265 = vst [vmem:[#allocation2 + $0x38] sm:$0xff] 0.0
          %266 = vst [vmem:[#allocation2 + $0x40] sm:$0xff] 0.0
          %267 = vst [vmem:[#allocation2 + $0x48] sm:$0xff] 0.0
          %268 = vst [vmem:[#allocation2 + $0x50] sm:$0xff] 0.0
          %269 = vst [vmem:[#allocation2 + $0x58] sm:$0xff] 0.0
          %270 = vst [vmem:[#allocation2 + $0x60] sm:$0xff] 0.0
          %271 = vst [vmem:[#allocation2 + $0x68] sm:$0xff] 0.0
          %272 = vst [vmem:[#allocation2 + $0x70] sm:$0xff] 0.0
          %273 = vst [vmem:[#allocation2 + $0x78] sm:$0xff] 0.0
        $region44: #{tpu_custom_call.1} parent=31 // pred_fallthru
          _
        %v274 = vld [vmem:[#allocation2] sm:$0xff]
        %v275 = vld [vmem:[#allocation2 + $0x8] sm:$0xff]
        %v276 = vld [vmem:[#allocation2 + $0x10] sm:$0xff]
        %v277 = vld [vmem:[#allocation2 + $0x18] sm:$0xff]
        %v278 = vld [vmem:[#allocation2 + $0x20] sm:$0xff]
        %v279 = vld [vmem:[#allocation2 + $0x28] sm:$0xff]
        %v280 = vld [vmem:[#allocation2 + $0x30] sm:$0xff]
        %v281 = vld [vmem:[#allocation2 + $0x38] sm:$0xff]
        %v282 = vld [vmem:[#allocation2 + $0x40] sm:$0xff]
        %v283 = vld [vmem:[#allocation2 + $0x48] sm:$0xff]
        %v284 = vld [vmem:[#allocation2 + $0x50] sm:$0xff]
        %v285 = vld [vmem:[#allocation2 + $0x58] sm:$0xff]
        %v286 = vld [vmem:[#allocation2 + $0x60] sm:$0xff]
        %v287 = vld [vmem:[#allocation2 + $0x68] sm:$0xff]
        %v288 = vld [vmem:[#allocation2 + $0x70] sm:$0xff]
        %v289 = vld [vmem:[#allocation2 + $0x78] sm:$0xff]
        %v290 = vld [vmem:[%s211] sm:$0xff]
        %v291 = vld [vmem:[%s211 + $0x8] sm:$0xff]
        %v292 = vld [vmem:[%s211 + $0x10] sm:$0xff]
        %v293 = vld [vmem:[%s211 + $0x18] sm:$0xff]
        %v294 = vld [vmem:[%s211 + $0x20] sm:$0xff]
        %v295 = vld [vmem:[%s211 + $0x28] sm:$0xff]
        %v296 = vld [vmem:[%s211 + $0x30] sm:$0xff]
        %v297 = vld [vmem:[%s211 + $0x38] sm:$0xff]
        %v298 = vld [vmem:[%s211 + $0x40] sm:$0xff]
        %v299 = vld [vmem:[%s211 + $0x48] sm:$0xff]
        %v300 = vld [vmem:[%s211 + $0x50] sm:$0xff]
        %v301 = vld [vmem:[%s211 + $0x58] sm:$0xff]
        %v302 = vld [vmem:[%s211 + $0x60] sm:$0xff]
        %v303 = vld [vmem:[%s211 + $0x68] sm:$0xff]
        %v304 = vld [vmem:[%s211 + $0x70] sm:$0xff]
        %v305 = vld [vmem:[%s211 + $0x78] sm:$0xff]
        %v306 = vld [vmem:[%s221] sm:$0xf]
        %v307 = vld [vmem:[%s221 + $0x4] sm:$0xf]
        %v308 = vld [vmem:[%s221 + $0x8] sm:$0xf]
        %v309 = vld [vmem:[%s221 + $0xc] sm:$0xf]
        %v310 = vld [vmem:[%s221 + $0x10] sm:$0xf]
        %v311 = vld [vmem:[%s221 + $0x14] sm:$0xf]
        %v312 = vld [vmem:[%s221 + $0x18] sm:$0xf]
        %v313 = vld [vmem:[%s221 + $0x1c] sm:$0xf]
        %v314 = vld [vmem:[%s221 + $0x20] sm:$0xf]
        %v315 = vld [vmem:[%s221 + $0x24] sm:$0xf]
        %v316 = vld [vmem:[%s221 + $0x28] sm:$0xf]
        %v317 = vld [vmem:[%s221 + $0x2c] sm:$0xf]
        %v318 = vld [vmem:[%s221 + $0x30] sm:$0xf]
        %v319 = vld [vmem:[%s221 + $0x34] sm:$0xf]
        %v320 = vld [vmem:[%s221 + $0x38] sm:$0xf]
        %v321 = vld [vmem:[%s221 + $0x3c] sm:$0xf]
        %v322 = vld [vmem:[%s221 + $0x40] sm:$0xf]
        %v323 = vld [vmem:[%s221 + $0x44] sm:$0xf]
        %v324 = vld [vmem:[%s221 + $0x48] sm:$0xf]
        %v325 = vld [vmem:[%s221 + $0x4c] sm:$0xf]
        %v326 = vld [vmem:[%s221 + $0x50] sm:$0xf]
        %v327 = vld [vmem:[%s221 + $0x54] sm:$0xf]
        %v328 = vld [vmem:[%s221 + $0x58] sm:$0xf]
        %v329 = vld [vmem:[%s221 + $0x5c] sm:$0xf]
        %v330 = vld [vmem:[%s221 + $0x60] sm:$0xf]
        %v331 = vld [vmem:[%s221 + $0x64] sm:$0xf]
        %v332 = vld [vmem:[%s221 + $0x68] sm:$0xf]
        %v333 = vld [vmem:[%s221 + $0x6c] sm:$0xf]
        %v334 = vld [vmem:[%s221 + $0x70] sm:$0xf]
        %v335 = vld [vmem:[%s221 + $0x74] sm:$0xf]
        %v336 = vld [vmem:[%s221 + $0x78] sm:$0xf]
        %v337 = vld [vmem:[%s221 + $0x7c] sm:$0xf]
        %v354 = vunpack.c.l.b16 %v290
        %v355 = vunpack.c.h.b16 %v290
        %v356 = vunpack.c.l.b16 %v291
        %v357 = vunpack.c.h.b16 %v291
        %v358 = vunpack.c.l.b16 %v292
        %v359 = vunpack.c.h.b16 %v292
        %v360 = vunpack.c.l.b16 %v293
        %v361 = vunpack.c.h.b16 %v293
        %v362 = vunpack.c.l.b16 %v294
        %v363 = vunpack.c.h.b16 %v294
        %v364 = vunpack.c.l.b16 %v295
        %v365 = vunpack.c.h.b16 %v295
        %v366 = vunpack.c.l.b16 %v296
        %v367 = vunpack.c.h.b16 %v296
        %v368 = vunpack.c.l.b16 %v297
        %v369 = vunpack.c.h.b16 %v297
        %v370 = vunpack.c.l.b16 %v298
        %v371 = vunpack.c.h.b16 %v298
        %v372 = vunpack.c.l.b16 %v299
        %v373 = vunpack.c.h.b16 %v299
        %v374 = vunpack.c.l.b16 %v300
        %v375 = vunpack.c.h.b16 %v300
        %v376 = vunpack.c.l.b16 %v301
        %v377 = vunpack.c.h.b16 %v301
        %v378 = vunpack.c.l.b16 %v302
        %v379 = vunpack.c.h.b16 %v302
        %v380 = vunpack.c.l.b16 %v303
        %v381 = vunpack.c.h.b16 %v303
        %v382 = vunpack.c.l.b16 %v304
        %v383 = vunpack.c.h.b16 %v304
        %v384 = vunpack.c.l.b16 %v305
        %v385 = vunpack.c.h.b16 %v305
        %v386 = vpack.c.b16 %v356, %v354
        %v387 = vpack.c.b16 %v357, %v355
        %v388 = vpack.c.b16 %v360, %v358
        %v389 = vpack.c.b16 %v361, %v359
        %v390 = vpack.c.b16 %v364, %v362
        %v391 = vpack.c.b16 %v365, %v363
        %v392 = vpack.c.b16 %v368, %v366
        %v393 = vpack.c.b16 %v369, %v367
        %v394 = vpack.c.b16 %v372, %v370
        %v395 = vpack.c.b16 %v373, %v371
        %v396 = vpack.c.b16 %v376, %v374
        %v397 = vpack.c.b16 %v377, %v375
        %v398 = vpack.c.b16 %v380, %v378
        %v399 = vpack.c.b16 %v381, %v379
        %v400 = vpack.c.b16 %v384, %v382
        %v401 = vpack.c.b16 %v385, %v383
        %v450 = vunpack.c.l.b16 %v306
        %v451 = vunpack.c.l.b16 %v307
        %v452 = vunpack.c.l.b16 %v308
        %v453 = vunpack.c.l.b16 %v309
        %v454 = vunpack.c.l.b16 %v310
        %v455 = vunpack.c.l.b16 %v311
        %v456 = vunpack.c.l.b16 %v312
        %v457 = vunpack.c.l.b16 %v313
        %v458 = vunpack.c.l.b16 %v314
        %v459 = vunpack.c.l.b16 %v315
        %v460 = vunpack.c.l.b16 %v316
        %v461 = vunpack.c.l.b16 %v317
        %v462 = vunpack.c.l.b16 %v318
        %v463 = vunpack.c.l.b16 %v319
        %v464 = vunpack.c.l.b16 %v320
        %v465 = vunpack.c.l.b16 %v321
        %v466 = vunpack.c.l.b16 %v322
        %v467 = vunpack.c.l.b16 %v323
        %v468 = vunpack.c.l.b16 %v324
        %v469 = vunpack.c.l.b16 %v325
        %v470 = vunpack.c.l.b16 %v326
        %v471 = vunpack.c.l.b16 %v327
        %v472 = vunpack.c.l.b16 %v328
        %v473 = vunpack.c.l.b16 %v329
        %v474 = vunpack.c.l.b16 %v330
        %v475 = vunpack.c.l.b16 %v331
        %v476 = vunpack.c.l.b16 %v332
        %v477 = vunpack.c.l.b16 %v333
        %v478 = vunpack.c.l.b16 %v334
        %v479 = vunpack.c.l.b16 %v335
        %v480 = vunpack.c.l.b16 %v336
        %v481 = vunpack.c.l.b16 %v337
        %v482 = vpack.c.b16 %v451, %v450
        %v483 = vpack.c.b16 %v453, %v452
        %v484 = vpack.c.b16 %v455, %v454
        %v485 = vpack.c.b16 %v457, %v456
        %v486 = vpack.c.b16 %v459, %v458
        %v487 = vpack.c.b16 %v461, %v460
        %v488 = vpack.c.b16 %v463, %v462
        %v489 = vpack.c.b16 %v465, %v464
        %v490 = vpack.c.b16 %v467, %v466
        %v491 = vpack.c.b16 %v469, %v468
        %v492 = vpack.c.b16 %v471, %v470
        %v493 = vpack.c.b16 %v473, %v472
        %v494 = vpack.c.b16 %v475, %v474
        %v495 = vpack.c.b16 %v477, %v476
        %v496 = vpack.c.b16 %v479, %v478
        %v497 = vpack.c.b16 %v481, %v480
        %514 = vmatpush.bf16.msra.mxu0 %v489
        %515 = vmatpush.bf16.msra.mxu0 %v488
        %516 = vmatpush.bf16.msra.mxu0 %v487
        %517 = vmatpush.bf16.msra.mxu0 %v486
        %518 = vmatpush.bf16.msra.mxu0 %v485
        %519 = vmatpush.bf16.msra.mxu0 %v484
        %520 = vmatpush.bf16.msra.mxu0 %v483
        %521 = vmatpush.bf16.msra.mxu0 %v482
        %522 = vmatmul.bf16.gmra.mxu0 %v386
        %v523 = vpop.f32.mrf.mxu0
        %v524 = vadd.f32 0.0, %v523
        %v525 = vpop.f32.mrf.mxu0
        %v526 = vadd.f32 0.0, %v525
        %527 = vmatmul.bf16.gmra.mxu0 %v388
        %v528 = vpop.f32.mrf.mxu0
        %v529 = vadd.f32 0.0, %v528
        %v530 = vpop.f32.mrf.mxu0
        %v531 = vadd.f32 0.0, %v530
        %532 = vmatmul.bf16.gmra.mxu0 %v390
        %v533 = vpop.f32.mrf.mxu0
        %v534 = vadd.f32 0.0, %v533
        %v535 = vpop.f32.mrf.mxu0
        %v536 = vadd.f32 0.0, %v535
        %537 = vmatmul.bf16.gmra.mxu0 %v392
        %v538 = vpop.f32.mrf.mxu0
        %v539 = vadd.f32 0.0, %v538
        %v540 = vpop.f32.mrf.mxu0
        %v541 = vadd.f32 0.0, %v540
        %542 = vmatmul.bf16.gmra.mxu0 %v394
        %v543 = vpop.f32.mrf.mxu0
        %v544 = vadd.f32 0.0, %v543
        %v545 = vpop.f32.mrf.mxu0
        %v546 = vadd.f32 0.0, %v545
        %547 = vmatmul.bf16.gmra.mxu0 %v396
        %v548 = vpop.f32.mrf.mxu0
        %v549 = vadd.f32 0.0, %v548
        %v550 = vpop.f32.mrf.mxu0
        %v551 = vadd.f32 0.0, %v550
        %552 = vmatmul.bf16.gmra.mxu0 %v398
        %v553 = vpop.f32.mrf.mxu0
        %v554 = vadd.f32 0.0, %v553
        %v555 = vpop.f32.mrf.mxu0
        %v556 = vadd.f32 0.0, %v555
        %557 = vmatmul.bf16.gmra.mxu0 %v400
        %v558 = vpop.f32.mrf.mxu0
        %v559 = vadd.f32 0.0, %v558
        %v560 = vpop.f32.mrf.mxu0
        %v561 = vadd.f32 0.0, %v560
        %562 = vdwg.mxu0
        %563 = vmatpush.bf16.msra.mxu0 %v497
        %564 = vmatpush.bf16.msra.mxu0 %v496
        %565 = vmatpush.bf16.msra.mxu0 %v495
        %566 = vmatpush.bf16.msra.mxu0 %v494
        %567 = vmatpush.bf16.msra.mxu0 %v493
        %568 = vmatpush.bf16.msra.mxu0 %v492
        %569 = vmatpush.bf16.msra.mxu0 %v491
        %570 = vmatpush.bf16.msra.mxu0 %v490
        %571 = vmatmul.bf16.gmra.mxu0 %v387
        %v572 = vpop.f32.mrf.mxu0
        %v573 = vadd.f32 %v524, %v572
        %v574 = vpop.f32.mrf.mxu0
        %v575 = vadd.f32 %v526, %v574
        %576 = vmatmul.bf16.gmra.mxu0 %v389
        %v577 = vpop.f32.mrf.mxu0
        %v578 = vadd.f32 %v529, %v577
        %v579 = vpop.f32.mrf.mxu0
        %v580 = vadd.f32 %v531, %v579
        %581 = vmatmul.bf16.gmra.mxu0 %v391
        %v582 = vpop.f32.mrf.mxu0
        %v583 = vadd.f32 %v534, %v582
        %v584 = vpop.f32.mrf.mxu0
        %v585 = vadd.f32 %v536, %v584
        %586 = vmatmul.bf16.gmra.mxu0 %v393
        %v587 = vpop.f32.mrf.mxu0
        %v588 = vadd.f32 %v539, %v587
        %v589 = vpop.f32.mrf.mxu0
        %v590 = vadd.f32 %v541, %v589
        %591 = vmatmul.bf16.gmra.mxu0 %v395
        %v592 = vpop.f32.mrf.mxu0
        %v593 = vadd.f32 %v544, %v592
        %v594 = vpop.f32.mrf.mxu0
        %v595 = vadd.f32 %v546, %v594
        %596 = vmatmul.bf16.gmra.mxu0 %v397
        %v597 = vpop.f32.mrf.mxu0
        %v598 = vadd.f32 %v549, %v597
        %v599 = vpop.f32.mrf.mxu0
        %v600 = vadd.f32 %v551, %v599
        %601 = vmatmul.bf16.gmra.mxu0 %v399
        %v602 = vpop.f32.mrf.mxu0
        %v603 = vadd.f32 %v554, %v602
        %v604 = vpop.f32.mrf.mxu0
        %v605 = vadd.f32 %v556, %v604
        %606 = vmatmul.bf16.gmra.mxu0 %v401
        %v607 = vpop.f32.mrf.mxu0
        %v608 = vadd.f32 %v559, %v607
        %v609 = vpop.f32.mrf.mxu0
        %v610 = vadd.f32 %v561, %v609
        %611 = vdwg.mxu0
        %v612 = vadd.f32 %v274, %v573
        %v613 = vadd.f32 %v275, %v575
        %v614 = vadd.f32 %v276, %v578
        %v615 = vadd.f32 %v277, %v580
        %v616 = vadd.f32 %v278, %v583
        %v617 = vadd.f32 %v279, %v585
        %v618 = vadd.f32 %v280, %v588
        %v619 = vadd.f32 %v281, %v590
        %v620 = vadd.f32 %v282, %v593
        %v621 = vadd.f32 %v283, %v595
        %v622 = vadd.f32 %v284, %v598
        %v623 = vadd.f32 %v285, %v600
        %v624 = vadd.f32 %v286, %v603
        %v625 = vadd.f32 %v287, %v605
        %v626 = vadd.f32 %v288, %v608
        %v627 = vadd.f32 %v289, %v610
        %628 = vst [vmem:[#allocation2] sm:$0xff] %v612
        %629 = vst [vmem:[#allocation2 + $0x8] sm:$0xff] %v613
        %630 = vst [vmem:[#allocation2 + $0x10] sm:$0xff] %v614
        %631 = vst [vmem:[#allocation2 + $0x18] sm:$0xff] %v615
        %632 = vst [vmem:[#allocation2 + $0x20] sm:$0xff] %v616
        %633 = vst [vmem:[#allocation2 + $0x28] sm:$0xff] %v617
        %634 = vst [vmem:[#allocation2 + $0x30] sm:$0xff] %v618
        %635 = vst [vmem:[#allocation2 + $0x38] sm:$0xff] %v619
        %636 = vst [vmem:[#allocation2 + $0x40] sm:$0xff] %v620
        %637 = vst [vmem:[#allocation2 + $0x48] sm:$0xff] %v621
        %638 = vst [vmem:[#allocation2 + $0x50] sm:$0xff] %v622
        %639 = vst [vmem:[#allocation2 + $0x58] sm:$0xff] %v623
        %640 = vst [vmem:[#allocation2 + $0x60] sm:$0xff] %v624
        %641 = vst [vmem:[#allocation2 + $0x68] sm:$0xff] %v625
        %642 = vst [vmem:[#allocation2 + $0x70] sm:$0xff] %v626
        %643 = vst [vmem:[#allocation2 + $0x78] sm:$0xff] %v627
        %p644 = scmp.eq.s32.totalorder %s28, 1
        // Predicated region
        $region45: #{tpu_custom_call.1} parent=31 // pred_check
          %p645 = pneg %p644
        $region46: #{tpu_custom_call.1} parent=31 // pred_check_branch
          %647 = sbr.rel (%p645) target = $region48
        $region47: #{tpu_custom_call.1} parent=31 // pred_region
          %v648 = vld [vmem:[#allocation2] sm:$0xff]
          %v649 = vld [vmem:[#allocation2 + $0x8] sm:$0xff]
          %v650 = vld [vmem:[#allocation2 + $0x10] sm:$0xff]
          %v651 = vld [vmem:[#allocation2 + $0x18] sm:$0xff]
          %v652 = vld [vmem:[#allocation2 + $0x20] sm:$0xff]
          %v653 = vld [vmem:[#allocation2 + $0x28] sm:$0xff]
          %v654 = vld [vmem:[#allocation2 + $0x30] sm:$0xff]
          %v655 = vld [vmem:[#allocation2 + $0x38] sm:$0xff]
          %v656 = vld [vmem:[#allocation2 + $0x40] sm:$0xff]
          %v657 = vld [vmem:[#allocation2 + $0x48] sm:$0xff]
          %v658 = vld [vmem:[#allocation2 + $0x50] sm:$0xff]
          %v659 = vld [vmem:[#allocation2 + $0x58] sm:$0xff]
          %v660 = vld [vmem:[#allocation2 + $0x60] sm:$0xff]
          %v661 = vld [vmem:[#allocation2 + $0x68] sm:$0xff]
          %v662 = vld [vmem:[#allocation2 + $0x70] sm:$0xff]
          %v663 = vld [vmem:[#allocation2 + $0x78] sm:$0xff]
          %v664 = vld [vmem:[%s2] sm:$0x1]
          %v666 = vperm.slane %v664, 0
          %v668 = vadd.f32 %v648, %v666
          %v669 = vadd.f32 %v649, %v666
          %v670 = vadd.f32 %v650, %v666
          %v671 = vadd.f32 %v651, %v666
          %v672 = vadd.f32 %v652, %v666
          %v673 = vadd.f32 %v653, %v666
          %v674 = vadd.f32 %v654, %v666
          %v675 = vadd.f32 %v655, %v666
          %v676 = vadd.f32 %v656, %v666
          %v677 = vadd.f32 %v657, %v666
          %v678 = vadd.f32 %v658, %v666
          %v679 = vadd.f32 %v659, %v666
          %v680 = vadd.f32 %v660, %v666
          %v681 = vadd.f32 %v661, %v666
          %v682 = vadd.f32 %v662, %v666
          %v683 = vadd.f32 %v663, %v666
          %v684 = vpack.c.bf16 %v668, %v668
          %v685 = vpack.c.bf16 %v669, %v669
          %v686 = vpack.c.bf16 %v670, %v670
          %v687 = vpack.c.bf16 %v671, %v671
          %v688 = vpack.c.bf16 %v672, %v672
          %v689 = vpack.c.bf16 %v673, %v673
          %v690 = vpack.c.bf16 %v674, %v674
          %v691 = vpack.c.bf16 %v675, %v675
          %v692 = vpack.c.bf16 %v676, %v676
          %v693 = vpack.c.bf16 %v677, %v677
          %v694 = vpack.c.bf16 %v678, %v678
          %v695 = vpack.c.bf16 %v679, %v679
          %v696 = vpack.c.bf16 %v680, %v680
          %v697 = vpack.c.bf16 %v681, %v681
          %v698 = vpack.c.bf16 %v682, %v682
          %v699 = vpack.c.bf16 %v683, %v683
          %700 = vst [vmem:[%s249] sm:$0xf] %v684
          %701 = vst [vmem:[%s249 + $0x4] sm:$0xf] %v685
          %702 = vst [vmem:[%s249 + $0x8] sm:$0xf] %v686
          %703 = vst [vmem:[%s249 + $0xc] sm:$0xf] %v687
          %704 = vst [vmem:[%s249 + $0x10] sm:$0xf] %v688
          %705 = vst [vmem:[%s249 + $0x14] sm:$0xf] %v689
          %706 = vst [vmem:[%s249 + $0x18] sm:$0xf] %v690
          %707 = vst [vmem:[%s249 + $0x1c] sm:$0xf] %v691
          %708 = vst [vmem:[%s249 + $0x20] sm:$0xf] %v692
          %709 = vst [vmem:[%s249 + $0x24] sm:$0xf] %v693
          %710 = vst [vmem:[%s249 + $0x28] sm:$0xf] %v694
          %711 = vst [vmem:[%s249 + $0x2c] sm:$0xf] %v695
          %712 = vst [vmem:[%s249 + $0x30] sm:$0xf] %v696
          %713 = vst [vmem:[%s249 + $0x34] sm:$0xf] %v697
          %714 = vst [vmem:[%s249 + $0x38] sm:$0xf] %v698
          %715 = vst [vmem:[%s249 + $0x3c] sm:$0xf] %v699
        $region48: #{tpu_custom_call.1} parent=31 // pred_fallthru
          _
        %s716 = sand.u32 %s118, 1
        %s717 = scalar_lea.sflag [#allocation5], %s716
        %s718 = sand.u32 %s118, 1
        %s719 = smul.addr %s718, 64
        %s720 = scalar_lea.vmem [#allocation8], %s719
        // Predicated region
        $region49: #{tpu_custom_call.1} parent=31 // pred_check
          %p721 = pneg %p128
        $region50: #{tpu_custom_call.1} parent=31 // pred_check_branch
          %723 = sbr.rel (%p721) target = $region52
        $region51: #{tpu_custom_call.1} parent=31 // pred_region
          %s724 = smul.u32 16, %s27
          %726 = vsyncadd %s717, 0
          %s727 = smul.addr %s724, 4
          %s728 = scalar_lea.hbm %s3, %s727
          %s729 = sshll.u32 %s720, 4
          %s730 = int_to_ptr.vmem [resolvable:$true] %s729
          %s731 = sshll.u32 %s728, 4
          %s732 = int_to_ptr.hbm [resolvable:$true] %s731
          %737 = dma.vmem_to_hbm [thread:$0]  %s730, 1024, %s732, %s717, 64, 64, 4
        $region52: #{tpu_custom_call.1} parent=31 // pred_fallthru
          _
      $region32: #{tpu_custom_call.1} parent=5 // pred_fallthru
        _
      %p738 = scmp.le.s32.totalorder 2, %s18
      // Predicated region
      $region53: #{tpu_custom_call.1} parent=5 // pred_check
        %p739 = pneg %p738
      $region54: #{tpu_custom_call.1} parent=5 // pred_check_branch
        %741 = sbr.rel (%p739) target = $region56
      $region55: #{tpu_custom_call.1} parent=5 // pred_region
        %s742 = ssub.s32 %s18, 2
        // Predicated region
        $region57: #{tpu_custom_call.1} parent=55 // pred_check
          %p743 = pneg %p134
        $region58: #{tpu_custom_call.1} parent=55 // pred_check_branch
          %745 = sbr.rel (%p743) target = $region60
        $region59: #{tpu_custom_call.1} parent=55 // pred_region
          %s746 = sand.u32 %s119, 1
          %s747 = scalar_lea.sflag [#allocation5], %s746
          %s748 = sand.u32 %s119, 1
          %s749 = smul.addr %s748, 64
          %s750 = scalar_lea.vmem [#allocation8], %s749
          %752 = dma.done %s747, 1024
        $region60: #{tpu_custom_call.1} parent=55 // pred_fallthru
          _
      $region56: #{tpu_custom_call.1} parent=5 // pred_fallthru
        _
    $region6: #{tpu_custom_call.1} parent=1 // loop_footer
      %s22 = sadd.s32 1, %s18
    $region7: #{tpu_custom_call.1} parent=1 // loop_footer_branch
      %17 = sbr.rel target = $region3
    $region8: #{tpu_custom_call.1} parent=1 // loop_exit
      _
    %753 = vsyncpa [#allocation4], 1
    %s754 = scalar_lea.sflag [#allocation4], 1
    %755 = vsyncpa %s754, 1
    %756 = vsyncpa [#allocation7], 1
    %s757 = scalar_lea.sflag [#allocation7], 1
    %758 = vsyncpa %s757, 1
    %759 = vsyncpa [#allocation5], 1
    %s760 = scalar_lea.sflag [#allocation5], 1
    %761 = vsyncpa %s760, 1

</llo_original>
